<compile_context>
chip_gen: v6e
topology: v6e:2x2x1
jax: 0.10.0
libtpu: 0.0.40
codegen_flags: <defaults>
</compile_context>

<pallas_src>
import jax
import jax.numpy as jnp
from jax.experimental import pallas as pl
from jax.experimental.pallas import tpu as pltpu


def _round_up(n, m):
    return (n + m - 1) // m * m


def _pick_hw_tile(hw):
    # Lane-dense tile (multiple of 128). Prefer wide tiles for HBM bandwidth,
    # but keep >= 2 lane tiles whenever possible so v7x's two TensorCores both
    # get grid steps along a "parallel" axis.
    if hw >= 4096:
        return 1024
    if hw >= 1024:
        return 512
    return 128


def _pool_kernel(x_ref, sum_ref):
    # x_ref:   (row_tile, hw_tile) tile of the flattened input (B*C, HW)
    # sum_ref: (row_tile, 1) running per-row spatial sum (accumulated over the
    #          last grid axis; stays resident in VMEM until the row block changes)
    @pl.when(pl.program_id(1) == 0)
    def _():
        sum_ref[...] = jnp.zeros_like(sum_ref)

    sum_ref[...] += jnp.sum(x_ref[...].astype(jnp.float32), axis=-1, keepdims=True)


def _rescale_kernel(x_ref, y_ref, o_ref):
    # x_ref: (row_tile, hw_tile), y_ref: (row_tile, 1) per-row gate, o_ref: like x_ref.
    o_ref[...] = (x_ref[...] * y_ref[...]).astype(o_ref.dtype)


def squeeze_excitation(x, w1, b1, w2, b2):
    """x: (B, C, H, W); w1: (hid, C); b1: (hid,); w2: (C, hid); b2: (C,). Returns (B, C, H, W)."""
    B, C, H, W = x.shape
    HW = H * W
    R = B * C

    x2 = x.reshape(R, HW)

    hw_tile = _pick_hw_tile(HW)
    HW_pad = _round_up(HW, hw_tile)
    row_tile = min(128, _round_up(R, 8))
    R_pad = _round_up(R, row_tile)

    if (R_pad, HW_pad) != (R, HW):
        # Zero padding: padded rows/cols contribute 0 to the sum and are sliced off at the end.
        x2p = jnp.pad(x2, ((0, R_pad - R), (0, HW_pad - HW)))
    else:
        x2p = x2

    n_r = R_pad // row_tile
    n_h = HW_pad // hw_tile

    # ---- Pass 1: global spatial sum per (batch, channel) row (streaming reduction) ----
    sums = pl.pallas_call(
        _pool_kernel,
        out_shape=jax.ShapeDtypeStruct((R_pad, 1), jnp.float32),
        grid_spec=pltpu.PrefetchScalarGridSpec(
            num_scalar_prefetch=0,
            grid=(n_r, n_h),  # reduction (HW) axis last
            in_specs=[pl.BlockSpec((row_tile, hw_tile), lambda r, h: (r, h))],
            out_specs=pl.BlockSpec((row_tile, 1), lambda r, h: (r, 0)),
        ),
        compiler_params=pltpu.CompilerParams(
            dimension_semantics=("parallel", "arbitrary")),
    )(x2p)

    # AdaptiveAvgPool2d(1): mean = sum * (1/HW), computed in f32.
    pooled = sums[:R, 0].reshape(B, C) * (1.0 / HW)

    # ---- Tiny FC gate in plain JAX (by design): ~B*C*hid MACs, negligible vs. streaming x.
    # Batched as one (B,C)@(C,hid) / (B,hid)@(hid,C) instead of per-sample degenerate matmuls.
    h = jnp.maximum(pooled @ w1.T + b1, 0.0)           # (B, hid)
    y = jax.nn.sigmoid(h @ w2.T + b2)                  # (B, C)

    y_col = y.reshape(R, 1).astype(jnp.float32)
    if R_pad != R:
        y_col = jnp.pad(y_col, ((0, R_pad - R), (0, 0)))

    # ---- Pass 2: lane-dense streaming rescale x * y ----
    out2p = pl.pallas_call(
        _rescale_kernel,
        out_shape=jax.ShapeDtypeStruct((R_pad, HW_pad), x.dtype),
        grid_spec=pltpu.PrefetchScalarGridSpec(
            num_scalar_prefetch=0,
            grid=(n_r, n_h),
            in_specs=[
                pl.BlockSpec((row_tile, hw_tile), lambda r, h: (r, h)),
                pl.BlockSpec((row_tile, 1), lambda r, h: (r, 0)),
            ],
            out_specs=pl.BlockSpec((row_tile, hw_tile), lambda r, h: (r, h)),
        ),
        compiler_params=pltpu.CompilerParams(
            dimension_semantics=("parallel", "parallel")),
    )(x2p, y_col)

    return out2p[:R, :HW].reshape(B, C, H, W)


def _reference(x, w1, b1, w2, b2):
    # Pure-JAX reference replicating the PyTorch forward.
    pooled = jnp.mean(x, axis=(2, 3))                    # (B, C)
    h = jnp.maximum(pooled @ w1.T + b1, 0.0)             # (B, hid)
    y = jax.nn.sigmoid(h @ w2.T + b2)                    # (B, C)
    return x * y[:, :, None, None]


if __name__ == "__main__":
    # Module hyper-params consistent with the forward pass.
    filter_size = 4      # channels C
    ratio = 2            # hidden = C // ratio = 2
    B, H, W = 2, 16, 16
    hid = filter_size // ratio

    key = jax.random.PRNGKey(0)
    kx, kw1, kb1, kw2, kb2 = jax.random.split(key, 5)

    x = jax.random.normal(kx, (B, filter_size, H, W), dtype=jnp.float32)
    # PyTorch Linear layout: weight (out, in).
    w1 = jax.random.normal(kw1, (hid, filter_size), dtype=jnp.float32) * 0.5
    b1 = jax.random.normal(kb1, (hid,), dtype=jnp.float32) * 0.1
    w2 = jax.random.normal(kw2, (filter_size, hid), dtype=jnp.float32) * 0.5
    b2 = jax.random.normal(kb2, (filter_size,), dtype=jnp.float32) * 0.1

    out = squeeze_excitation(x, w1, b1, w2, b2)
    out = jax.block_until_ready(out)

    ref = _reference(x, w1, b1, w2, b2)
    assert out.shape == (B, filter_size, H, W)
    assert jnp.allclose(out, ref, atol=1e-5, rtol=1e-5), "mismatch vs reference"

    print("KERNEL_OK")
</pallas_src>

<mosaic_0001>
module attributes {stable_mosaic.version = 11 : i64} {
  func.func @_pool_kernel(%arg0: i32, %arg1: i32, %arg2: memref<8x128xf32, #tpu.memory_space<vmem>>, %arg3: memref<8x1xf32, #tpu.memory_space<vmem>>) attributes {dimension_semantics = [#tpu.dimension_semantics<parallel>, #tpu.dimension_semantics<arbitrary>], iteration_bounds = array<i64: 1, 2>, scalar_prefetch = 0 : i64, scratch_operands = 0 : i64, tpu.core_type = #tpu.core_type<tc>, window_params = [{transform_indices = @transform_0, window_bounds = array<i64: 8, 128>}, {transform_indices = @transform_1, window_bounds = array<i64: 8, 1>}]} {
    %c0_i32 = arith.constant 0 : i32
    %0 = arith.cmpi eq, %arg1, %c0_i32 : i32
    %1 = arith.extui %0 : i1 to i32
    %c0_i32_0 = arith.constant 0 : i32
    %2 = arith.cmpi ne, %1, %c0_i32_0 : i32
    scf.if %2 {
      %cst_6 = arith.constant 0.000000e+00 : f32
      %9 = vector.broadcast %cst_6 : f32 to vector<8x1xf32>
      %c0_7 = arith.constant 0 : index
      %c0_8 = arith.constant 0 : index
      %10 = vector.load %arg3[%c0_7, %c0_8] : memref<8x1xf32, #tpu.memory_space<vmem>>, vector<8x1xf32>
      tpu.vector_store %arg3[%c0_7, %c0_8], %9 {strides = array<i32>} : memref<8x1xf32, #tpu.memory_space<vmem>>, vector<8x1xf32>,
    } else {
    }
    %c0 = arith.constant 0 : index
    %c0_1 = arith.constant 0 : index
    %3 = vector.load %arg3[%c0, %c0_1] : memref<8x1xf32, #tpu.memory_space<vmem>>, vector<8x1xf32>
    %c0_2 = arith.constant 0 : index
    %c0_3 = arith.constant 0 : index
    %4 = vector.load %arg2[%c0_2, %c0_3] : memref<8x128xf32, #tpu.memory_space<vmem>>, vector<8x128xf32>
    %cst = arith.constant dense<0.000000e+00> : vector<8xf32>
    %5 = vector.multi_reduction <add>, %4, %cst [1] : vector<8x128xf32> to vector<8xf32>
    %6 = vector.shape_cast %5 : vector<8xf32> to vector<8x1xf32>
    %7 = arith.addf %3, %6 : vector<8x1xf32>
    %c0_4 = arith.constant 0 : index
    %c0_5 = arith.constant 0 : index
    %8 = vector.load %arg3[%c0_4, %c0_5] : memref<8x1xf32, #tpu.memory_space<vmem>>, vector<8x1xf32>
    tpu.vector_store %arg3[%c0_4, %c0_5], %7 {strides = array<i32>} : memref<8x1xf32, #tpu.memory_space<vmem>>, vector<8x1xf32>,
    return
  }
  func.func @transform_0(%arg0: i32, %arg1: i32) -> (i32, i32) {
    %c0_i32 = arith.constant 0 : i32
    return %arg0, %arg1 : i32, i32
  }
  func.func @transform_1(%arg0: i32, %arg1: i32) -> (i32, i32) {
    %c0_i32 = arith.constant 0 : i32
    %c0_i32_0 = arith.constant 0 : i32
    return %arg0, %c0_i32 : i32, i32
  }
}

</mosaic_0001>

<llo_original>
// kernel: tpu_custom_call.1
$region0: #{tpu_custom_call.1}
  #allocation0 [shape = 'u32[]', space=smem, size = 0x4, offset = 0x4, fixed_abs, tag = 'smem constant byte address 0x4 - core index']
  #allocation1 [shape = 'u32[144,128]{1,0:T(1,128)}', space=vmem, size = 0x12000, scoped, tag = 'internal scratch']
  %s0 = inlined_call_operand.hbm [shape: f32[8,256], index: 0, kind: input, shape index: {}]
  %s1 = inlined_call_operand.vmem [shape: f32[8,1], index: 1, kind: output, shape index: {}]
  %s2 = sld [smem:[#allocation0]]
  $region45: #{tpu_custom_call.1} parent=0
    _
  %s4 = ssub.s32 1, %s2
  %s5 = scalar_select 0, %s4, %s2
  $region1: #{tpu_custom_call.1} parent=0
    #allocation2 [shape = 'u8[8192]{0}', space=vmem, size = 0x2000, scoped, tag = 'input window, operand 0']
    #allocation3 [shape = 's32[2]{0}', space=sflag, size = 0x8, scoped, tag = 'scoped memory for tpu_custom_call.1']
    %6 = vsyncpa [#allocation3], 0
    %s7 = scalar_lea.sflag [#allocation3], 1
    %8 = vsyncpa %s7, 0
    loop: start=0, step=1, limit=4
    $region2: #{tpu_custom_call.1} parent=1 // loop_pre_header
      _
    $region3: #{tpu_custom_call.1} parent=1 // loop_header
      %s10 = sphi 0, %s14
      %p11 = scmp.ge.s32.totalorder %s10, 4
      %s17 = sphi 0, %s29
      %s18 = sphi 0, %s25
      %s19 = sphi 0, %s17
      %s20 = sphi 0, %s18
      %s21 = sphi 0, %s19
      %s22 = sphi 0, %s20
      %s34 = sphi 0, %s36
      %s37 = sphi 0, %s34
      %s38 = sphi 0, %s37
      %s54 = sphi 0, %s38
      %s60 = sphi 0, %s62
      %s63 = sphi 0, %s60
      %s64 = sphi 0, %s63
      %s80 = sphi 0, %s64
    $region4: #{tpu_custom_call.1} parent=1 // loop_header_branch
      %13 = sbr.rel (%p11) target = $region8
    $region5: #{tpu_custom_call.1} parent=1 // loop_body
      %s15 = ssub.s32 %s10, 1
      %s16 = ssub.s32 %s10, 2
      %s23 = sadd.s32 1, %s18
      %p24 = scmp.ge.s32.totalorder %s23, 2
      %s25 = scalar_select %p24, 0, %s23
      %s26 = sadd.s32 1, %s17
      %s27 = scalar_select %p24, %s26, %s17
      %p28 = scmp.ge.s32.totalorder %s27, 1
      %s29 = scalar_select %p28, 0, %s27
      %s30 = ssub.s32 %s17, %s29
      %s31 = ssub.s32 %s18, %s25
      %s32 = sor.u32 %s30, %s31
      %p33 = scmp.eq.s32.totalorder %s32, 0
      %s35 = sadd.s32 %s34, 1
      %s36 = scalar_select %p33, %s34, %s35
      %p39 = pneg %p33
      %p40 = scmp.eq.s32.totalorder %s10, 1
      %p41 = por %p39, %p40
      %p42 = scmp.ne.s32.totalorder %s34, %s37
      %p43 = scmp.eq.s32.totalorder %s10, 0
      %p44 = por %p42, %p43
      %p45 = scmp.ne.s32.totalorder %s34, %s37
      %p46 = scmp.eq.s32.totalorder %s15, 1
      %p47 = por %p45, %p46
      %p48 = scmp.ne.s32.totalorder %s37, %s38
      %p49 = scmp.eq.s32.totalorder %s15, 0
      %p50 = por %p48, %p49
      %p51 = scmp.ne.s32.totalorder %s37, %s38
      %p52 = scmp.eq.s32.totalorder %s16, 1
      %p53 = por %p51, %p52
      %p55 = scmp.ne.s32.totalorder %s38, %s54
      %p56 = scmp.eq.s32.totalorder %s16, 0
      %p57 = por %p55, %p56
      %s58 = ssub.s32 %s17, %s29
      %p59 = scmp.eq.s32.totalorder %s58, 0
      %s61 = sadd.s32 %s60, 1
      %s62 = scalar_select %p59, %s60, %s61
      %p65 = pneg %p59
      %p66 = scmp.eq.s32.totalorder %s10, 1
      %p67 = por %p65, %p66
      %p68 = scmp.ne.s32.totalorder %s60, %s63
      %p69 = scmp.eq.s32.totalorder %s10, 0
      %p70 = por %p68, %p69
      %p71 = scmp.ne.s32.totalorder %s60, %s63
      %p72 = scmp.eq.s32.totalorder %s15, 1
      %p73 = por %p71, %p72
      %p74 = scmp.ne.s32.totalorder %s63, %s64
      %p75 = scmp.eq.s32.totalorder %s15, 0
      %p76 = por %p74, %p75
      %p77 = scmp.ne.s32.totalorder %s63, %s64
      %p78 = scmp.eq.s32.totalorder %s16, 1
      %p79 = por %p77, %p78
      %p81 = scmp.ne.s32.totalorder %s64, %s80
      %p82 = scmp.eq.s32.totalorder %s16, 0
      %p83 = por %p81, %p82
      %p84 = scmp.le.s32.totalorder 1, %s10
      %p85 = scmp.lt.s32.totalorder %s10, 3
      %p86 = pnand %p84, %p85
      %p87 = pneg %p86
      // Predicated region
      $region9: #{tpu_custom_call.1} parent=5 // pred_check
        _
      $region10: #{tpu_custom_call.1} parent=5 // pred_check_branch
        %89 = sbr.rel (%p86) target = $region12
      $region11: #{tpu_custom_call.1} parent=5 // pred_region
        %s90 = ssub.s32 %s10, 1
      $region12: #{tpu_custom_call.1} parent=5 // pred_fallthru
        _
      %p91 = scmp.lt.s32.totalorder %s10, 2
      // Predicated region
      $region13: #{tpu_custom_call.1} parent=5 // pred_check
        %p92 = pneg %p91
      $region14: #{tpu_custom_call.1} parent=5 // pred_check_branch
        %94 = sbr.rel (%p92) target = $region16
      $region15: #{tpu_custom_call.1} parent=5 // pred_region
        // Predicated region
        $region17: #{tpu_custom_call.1} parent=15 // pred_check
          %p95 = pneg %p44
        $region18: #{tpu_custom_call.1} parent=15 // pred_check_branch
          %97 = sbr.rel (%p95) target = $region20
        $region19: #{tpu_custom_call.1} parent=15 // pred_region
          %s98 = sand.u32 %s34, 1
          %s99 = scalar_lea.sflag [#allocation3], %s98
          %s100 = sand.u32 %s34, 1
          %s101 = smul.addr %s100, 8
          %s102 = scalar_lea.vmem [#allocation2], %s101
          %s104 = ssub.s32 128, 128
          %105 = vsyncadd %s99, %s104
          %s106 = smul.addr %s17, 2
          %s107 = sadd.s32 %s18, %s106
          %s108 = smul.addr %s107, 128
          %s109 = scalar_lea.hbm %s0, %s108
          %s111 = sshll.u32 %s102, 4
          %s112 = int_to_ptr.vmem [resolvable:$true] %s111
          %114 = dma.hbm_to_vmem [thread:$0]  %s109, 128, %s112, %s99
        $region20: #{tpu_custom_call.1} parent=15 // pred_fallthru
          _
      $region16: #{tpu_custom_call.1} parent=5 // pred_fallthru
        _
      %p115 = scmp.le.s32.totalorder 1, %s10
      %p116 = scmp.lt.s32.totalorder %s10, 3
      %p117 = pnand %p115, %p116
      %p118 = pneg %p117
      // Predicated region
      $region21: #{tpu_custom_call.1} parent=5 // pred_check
        _
      $region22: #{tpu_custom_call.1} parent=5 // pred_check_branch
        %120 = sbr.rel (%p117) target = $region24
      $region23: #{tpu_custom_call.1} parent=5 // pred_region
        %s121 = ssub.s32 %s10, 1
        %s122 = sand.u32 %s37, 1
        %s123 = scalar_lea.sflag [#allocation3], %s122
        %s124 = sand.u32 %s37, 1
        %s125 = smul.addr %s124, 8
        %s126 = scalar_lea.vmem [#allocation2], %s125
        // Predicated region
        $region25: #{tpu_custom_call.1} parent=23 // pred_check
          %p127 = pneg %p50
        $region26: #{tpu_custom_call.1} parent=23 // pred_check_branch
          %129 = sbr.rel (%p127) target = $region28
        $region27: #{tpu_custom_call.1} parent=23 // pred_region
          %130 = dma.done %s123, 128
        $region28: #{tpu_custom_call.1} parent=23 // pred_fallthru
          _
        %s131 = sand.u32 %s37, 1
        %s132 = scalar_lea.sflag [#allocation3], %s131
        %s133 = sand.u32 %s37, 1
        %s134 = smul.addr %s133, 8
        %s135 = scalar_lea.vmem [#allocation2], %s134
        %p136 = pneg %p50
        %p137 = pneg %p47
        %p138 = pneg %p76
        %p139 = pneg %p73
        %p140 = scmp.lt.s32.totalorder %s19, 0
        %s141 = scalar_select %p140, %s19, 0
        %s142 = smul.addr %s141, 8
        %s143 = scalar_lea.vmem %s1, %s142
        %p144 = scmp.lt.s32.totalorder %s19, 0
        %s145 = scalar_select %p144, %s19, 0
        %s146 = smul.addr %s145, 8
        %s147 = scalar_lea.vmem %s1, %s146
        %p148 = scmp.eq.s32.totalorder %s20, 0
        // Predicated region
        $region29: #{tpu_custom_call.1} parent=23 // pred_check
          %p149 = pneg %p148
        $region30: #{tpu_custom_call.1} parent=23 // pred_check_branch
          %151 = sbr.rel (%p149) target = $region32
        $region31: #{tpu_custom_call.1} parent=23 // pred_region
          %vm152 = vcmask 7168
          %153 = vst.msk [vmem:[%s147] sm:$0xff] %vm152, 0.0
        $region32: #{tpu_custom_call.1} parent=23 // pred_fallthru
          _
        %v154 = vld [vmem:[%s147] sm:$0xff]
        %v155 = vld [vmem:[%s126] sm:$0xff]
        %156 = vadd.xlane.f32.xlu0 %v155
        %v157 = vpop.xlane.xlu0 %156
        %v158 = vadd.f32 %v154, %v157
        %vm159 = vcmask 7168
        %160 = vst.msk [vmem:[%s147] sm:$0xff] %vm159, %v158
        %p161 = scmp.lt.s32.totalorder %s19, 0
        %s162 = scalar_select %p161, %s19, 0
        %s163 = smul.addr %s162, 8
        %s164 = scalar_lea.vmem %s1, %s163
        // Predicated region
        $region33: #{tpu_custom_call.1} parent=23 // pred_check
          %p165 = pneg %p73
        $region34: #{tpu_custom_call.1} parent=23 // pred_check_branch
          %167 = sbr.rel (%p165) target = $region36
        $region35: #{tpu_custom_call.1} parent=23 // pred_region
          _
        $region36: #{tpu_custom_call.1} parent=23 // pred_fallthru
          _
        // Predicated region
        $region37: #{tpu_custom_call.1} parent=23 // pred_check
          %p168 = pneg %p73
        $region38: #{tpu_custom_call.1} parent=23 // pred_check_branch
          %170 = sbr.rel (%p168) target = $region40
        $region39: #{tpu_custom_call.1} parent=23 // pred_region
          %p171 = scmp.lt.s32.totalorder %s19, 0
          %s172 = scalar_select %p171, %s19, 0
          %s173 = smul.addr %s172, 8
          %s174 = scalar_lea.vmem %s1, %s173
        $region40: #{tpu_custom_call.1} parent=23 // pred_fallthru
          _
      $region24: #{tpu_custom_call.1} parent=5 // pred_fallthru
        _
      %p175 = scmp.le.s32.totalorder 2, %s10
      // Predicated region
      $region41: #{tpu_custom_call.1} parent=5 // pred_check
        %p176 = pneg %p175
      $region42: #{tpu_custom_call.1} parent=5 // pred_check_branch
        %178 = sbr.rel (%p176) target = $region44
      $region43: #{tpu_custom_call.1} parent=5 // pred_region
        %s179 = ssub.s32 %s10, 2
      $region44: #{tpu_custom_call.1} parent=5 // pred_fallthru
        _
    $region6: #{tpu_custom_call.1} parent=1 // loop_footer
      %s14 = sadd.s32 1, %s10
    $region7: #{tpu_custom_call.1} parent=1 // loop_footer_branch
      %9 = sbr.rel target = $region3
    $region8: #{tpu_custom_call.1} parent=1 // loop_exit
      _
    %180 = vsyncpa [#allocation3], 1
    %s181 = scalar_lea.sflag [#allocation3], 1
    %182 = vsyncpa %s181, 1

</llo_original>
